<compile_context>
chip_gen: v6e
topology: v6e:2x2x1
jax: 0.10.0
libtpu: 0.0.40
codegen_flags: <defaults>
</compile_context>

<pallas_src>
import functools

import jax
import jax.numpy as jnp
from jax import lax
from jax.experimental import pallas as pl
from jax.experimental.pallas import tpu as pltpu

NEG_SLOPE = 0.01   # nn.LeakyReLU() default negative_slope
BN_EPS = 1e-5      # nn.BatchNorm2d default eps


def _lrelu(v):
    return jnp.where(v > 0, v, NEG_SLOPE * v)


def _fused_kernel(a_ref, wb_ref, p_ref, g_ref, b_ref, out_ref, *, inv_count):
    """Fused LeakyReLU + factorized conv pair + channel concat + BatchNorm.

    a_ref  : (N*T, 3*W*2*C_in)  pre-stacked: block j holds time row-pair t+j of the output
             step's receptive field; within a block lane = w*(2*C_in) + parity*C_in + ci.
    wb_ref : (3*W*2*C_in, W*C_out)  stacked, w-block-diagonal conv weight (tap 5 is zero).
    p_ref  : (W*C_out, W*C_out)     0/1 projector: per-channel sum over w, replicated back.
    g_ref  : (1, W*C_out)           gamma tiled over w.
    b_ref  : (1, W*C_out)           beta  tiled over w.
    out_ref: (N*T, W*C_out)         lane = w*C_out + co.   Written exactly once.
    """
    # LeakyReLU once over the whole lane-dense block (elementwise, replication-safe).
    y = _lrelu(a_ref[...].astype(jnp.float32))                       # (M, 3*L_in)

    # Both (4,1)/(2,1) convs + channel concat for the WHOLE batch as one MXU matmul.
    z = jnp.dot(y, wb_ref[...], preferred_element_type=jnp.float32)  # (M, L_out)

    # BatchNorm2d, training-mode batch stats, one-pass variance (all f32).
    # Sum / sum-of-squares over the M (= N*T) rows via the XLU, then ONE projector matmul
    # reduces over w per channel and replicates the result back to every (w, c) lane.
    s = jnp.sum(z, axis=0, keepdims=True)                            # (1, L_out)
    ss = jnp.sum(z * z, axis=0, keepdims=True)                       # (1, L_out)
    red = jnp.dot(jnp.concatenate([s, ss], axis=0), p_ref[...],
                  preferred_element_type=jnp.float32) * inv_count    # (2, L_out)
    mean = red[0:1, :]
    var = red[1:2, :] - mean * mean
    scale = lax.rsqrt(var + BN_EPS) * g_ref[...]                     # (1, L_out)
    shift = b_ref[...] - mean * scale

    out_ref[...] = z * scale + shift                                 # single store


def make_factorized_reduce_timewise(w1_oihw, w2_oihw, gamma, beta, W):
    """Build the forward fn.  Parameter-only constants are computed ONCE here (hoisted)."""
    C_half, C_in = int(w1_oihw.shape[0]), int(w1_oihw.shape[1])
    C_out = 2 * C_half
    L_in = W * 2 * C_in        # lane width of one stacked row-pair block (== 128 in the test)
    L_out = W * C_out          # output lane width                          (== 128 in the test)

    # ---- stacked, w-block-diagonal weight: tap k == original time row 2t+k ----
    # w1 fills taps 0..3 / cols[:C_half]; w2 fills taps 1..4 / cols[C_half:]; tap 5 is zero
    # (it can only touch the zero pad row, which therefore never contributes).
    wt = jnp.zeros((6, C_in, C_out), jnp.float32)
    wt = wt.at[0:4, :, 0:C_half].set(jnp.transpose(w1_oihw[:, :, :, 0], (2, 1, 0)))
    wt = wt.at[1:5, :, C_half:].set(jnp.transpose(w2_oihw[:, :, :, 0], (2, 1, 0)))
    eye_w = jnp.eye(W, dtype=jnp.float32)
    wb = (eye_w[None, :, None, None, :, None]
          * wt.reshape(3, 1, 2, C_in, 1, C_out)).reshape(3 * L_in, L_out)

    # Channel projector + lane-tiled affine params.
    proj = jnp.tile(jnp.eye(C_out, dtype=jnp.float32), (W, W))               # (L_out, L_out)
    g128 = jnp.tile(gamma.reshape(1, C_out).astype(jnp.float32), (1, W))
    b128 = jnp.tile(beta.reshape(1, C_out).astype(jnp.float32), (1, W))

    @jax.jit
    def forward(x_nchw):
        N, c_in, H, w_in = x_nchw.shape
        assert c_in == C_in and w_in == W
        assert H % 2 == 1, "time length must be odd so both branches produce the same T_out"
        T = (H - 4) // 2 + 1
        M = N * T

        # ---- input layout plumbing (the only per-call XLA work) ----
        # pad time to 2*(T+2) rows, fold (even/odd, C_in) into lanes, then lane-concat the
        # 3 consecutive row-pairs each output step needs -> (N*T, 3*L_in), 2-D and lane-dense.
        xp = jnp.pad(x_nchw, ((0, 0), (0, 0), (0, 2 * (T + 2) - H), (0, 0))).astype(jnp.float32)
        xk = jnp.transpose(xp.reshape(N, C_in, T + 2, 2, W), (0, 2, 4, 3, 1))
        xk = xk.reshape(N, T + 2, L_in)
        a = jnp.concatenate([xk[:, 0:T], xk[:, 1:T + 1], xk[:, 2:T + 2]], axis=-1)
        a = a.reshape(M, 3 * L_in)

        out = pl.pallas_call(
            functools.partial(_fused_kernel, inv_count=1.0 / float(N * T * W)),
            grid=(1,),
            in_specs=[
                pl.BlockSpec((M, 3 * L_in), lambda i: (0, 0)),
                pl.BlockSpec((3 * L_in, L_out), lambda i: (0, 0)),
                pl.BlockSpec((L_out, L_out), lambda i: (0, 0)),
                pl.BlockSpec((1, L_out), lambda i: (0, 0)),
                pl.BlockSpec((1, L_out), lambda i: (0, 0)),
            ],
            out_specs=pl.BlockSpec((M, L_out), lambda i: (0, 0)),
            out_shape=jax.ShapeDtypeStruct((M, L_out), jnp.float32),
            compiler_params=pltpu.CompilerParams(
                dimension_semantics=("arbitrary",),
                vmem_limit_bytes=32 * 1024 * 1024,
            ),
        )(a, wb, proj, g128, b128)

        # (N*T, W*C_out) -> NCHW
        return jnp.transpose(out.reshape(N, T, W, C_out), (0, 3, 1, 2))

    return forward


def reference(x, w1_oihw, w2_oihw, gamma, beta):
    """Pure-JAX reference (NCHW) of the same forward semantics."""
    y = jnp.where(x > 0, x, NEG_SLOPE * x)
    dn = lax.conv_dimension_numbers(x.shape, w1_oihw.shape, ("NCHW", "OIHW", "NCHW"))
    o1 = lax.conv_general_dilated(y, w1_oihw, (2, 1), "VALID", dimension_numbers=dn)
    o2 = lax.conv_general_dilated(y[:, :, 1:, :], w2_oihw, (2, 1), "VALID",
                                  dimension_numbers=dn)
    out = jnp.concatenate([o1, o2], axis=1)
    mean = out.mean(axis=(0, 2, 3), keepdims=True)
    var = ((out - mean) ** 2).mean(axis=(0, 2, 3), keepdims=True)
    out = (out - mean) * lax.rsqrt(var + BN_EPS)
    return out * gamma.reshape(1, -1, 1, 1) + beta.reshape(1, -1, 1, 1)


if __name__ == "__main__":
    key = jax.random.PRNGKey(0)
    k1, k2, k3, k4, k5 = jax.random.split(key, 5)

    N, C_in, H, W = 2, 4, 17, 16   # H = time axis (odd), W = feature axis
    C_out = 8
    C_half = C_out // 2

    x = jax.random.normal(k1, (N, C_in, H, W), jnp.float32)
    # Conv2d(C_in, C_out//2, (4,1), bias=False) weight shape: (C_half, C_in, 4, 1)
    w1 = 0.2 * jax.random.normal(k2, (C_half, C_in, 4, 1), jnp.float32)
    w2 = 0.2 * jax.random.normal(k3, (C_half, C_in, 4, 1), jnp.float32)
    # BatchNorm2d(C_out, affine=True) params (non-trivial to exercise the affine path)
    gamma = 1.0 + 0.1 * jax.random.normal(k4, (C_out,), jnp.float32)
    beta = 0.1 * jax.random.normal(k5, (C_out,), jnp.float32)

    fwd = make_factorized_reduce_timewise(w1, w2, gamma, beta, W)
    out = jax.block_until_ready(fwd(x))

    ref = reference(x, w1, w2, gamma, beta)
    T_out = (H - 4) // 2 + 1
    assert out.shape == (N, C_out, T_out, W), out.shape
    max_err = float(jnp.max(jnp.abs(out - ref)))
    assert max_err < 2e-4, f"max abs error too large: {max_err}"

    print("KERNEL_OK")
</pallas_src>

<mosaic_0001>
module attributes {stable_mosaic.version = 11 : i64} {
  func.func @_fused_kernel(%arg0: i32, %arg1: memref<14x384xf32, #tpu.memory_space<vmem>>, %arg2: memref<384x128xf32, #tpu.memory_space<vmem>>, %arg3: memref<128x128xf32, #tpu.memory_space<vmem>>, %arg4: memref<1x128xf32, #tpu.memory_space<vmem>>, %arg5: memref<1x128xf32, #tpu.memory_space<vmem>>, %arg6: memref<14x128xf32, #tpu.memory_space<vmem>>) attributes {dimension_semantics = [#tpu.dimension_semantics<arbitrary>], iteration_bounds = array<i64: 1>, scalar_prefetch = 0 : i64, scratch_operands = 0 : i64, tpu.core_type = #tpu.core_type<tc>, window_params = [{pipeline_mode = #tpu.pipeline_mode<synchronous>, transform_indices = @transform_0, window_bounds = array<i64: 14, 384>}, {pipeline_mode = #tpu.pipeline_mode<synchronous>, transform_indices = @transform_1, window_bounds = array<i64: 384, 128>}, {pipeline_mode = #tpu.pipeline_mode<synchronous>, transform_indices = @transform_2, window_bounds = array<i64: 128, 128>}, {pipeline_mode = #tpu.pipeline_mode<synchronous>, transform_indices = @transform_3, window_bounds = array<i64: 1, 128>}, {pipeline_mode = #tpu.pipeline_mode<synchronous>, transform_indices = @transform_4, window_bounds = array<i64: 1, 128>}, {pipeline_mode = #tpu.pipeline_mode<synchronous>, transform_indices = @transform_5, window_bounds = array<i64: 14, 128>}]} {
    %c0 = arith.constant 0 : index
    %c0_0 = arith.constant 0 : index
    %0 = vector.load %arg1[%c0, %c0_0] : memref<14x384xf32, #tpu.memory_space<vmem>>, vector<14x384xf32>
    %cst = arith.constant 0.000000e+00 : f32
    %1 = vector.broadcast %cst : f32 to vector<14x384xf32>
    %2 = arith.cmpf ogt, %0, %1 : vector<14x384xf32>
    %cst_1 = arith.constant 0.00999999977 : f32
    %3 = vector.broadcast %cst_1 : f32 to vector<14x384xf32>
    %4 = arith.mulf %3, %0 : vector<14x384xf32>
    %5 = arith.select %2, %0, %4 : vector<14x384xi1>, vector<14x384xf32>
    %c0_2 = arith.constant 0 : index
    %c0_3 = arith.constant 0 : index
    %6 = vector.load %arg2[%c0_2, %c0_3] : memref<384x128xf32, #tpu.memory_space<vmem>>, vector<384x128xf32>
    %cst_4 = arith.constant dense<0.000000e+00> : vector<14x128xf32>
    %7 = tpu.matmul %5, %6, %cst_4 {dimension_numbers = #tpu.dot_dimension_numbers<[1], [0], [0], [1], [0, 0, 1, 1], [], []>} : vector<14x384xf32>, vector<384x128xf32>, vector<14x128xf32> -> vector<14x128xf32>
    %cst_5 = arith.constant dense<0.000000e+00> : vector<128xf32>
    %8 = vector.multi_reduction <add>, %7, %cst_5 [0] : vector<14x128xf32> to vector<128xf32>
    %9 = vector.shape_cast %8 : vector<128xf32> to vector<1x128xf32>
    %10 = arith.mulf %7, %7 : vector<14x128xf32>
    %cst_6 = arith.constant dense<0.000000e+00> : vector<128xf32>
    %11 = vector.multi_reduction <add>, %10, %cst_6 [0] : vector<14x128xf32> to vector<128xf32>
    %12 = vector.shape_cast %11 : vector<128xf32> to vector<1x128xf32>
    %13 = tpu.concatenate %9, %12 in 0 : vector<1x128xf32>, vector<1x128xf32> -> vector<2x128xf32>
    %c0_7 = arith.constant 0 : index
    %c0_8 = arith.constant 0 : index
    %14 = vector.load %arg3[%c0_7, %c0_8] : memref<128x128xf32, #tpu.memory_space<vmem>>, vector<128x128xf32>
    %cst_9 = arith.constant dense<0.000000e+00> : vector<2x128xf32>
    %15 = tpu.matmul %13, %14, %cst_9 {dimension_numbers = #tpu.dot_dimension_numbers<[1], [0], [0], [1], [0, 0, 1, 1], [], []>} : vector<2x128xf32>, vector<128x128xf32>, vector<2x128xf32> -> vector<2x128xf32>
    %cst_10 = arith.constant 0.00446428591 : f32
    %16 = vector.broadcast %cst_10 : f32 to vector<2x128xf32>
    %17 = arith.mulf %15, %16 : vector<2x128xf32>
    %18 = vector.extract_strided_slice %17 {offsets = [0, 0], sizes = [1, 128], strides = [1, 1]} : vector<2x128xf32> to vector<1x128xf32>
    %19 = vector.extract_strided_slice %17 {offsets = [1, 0], sizes = [1, 128], strides = [1, 1]} : vector<2x128xf32> to vector<1x128xf32>
    %20 = arith.mulf %18, %18 : vector<1x128xf32>
    %21 = arith.subf %19, %20 : vector<1x128xf32>
    %cst_11 = arith.constant 9.99999974E-6 : f32
    %22 = vector.broadcast %cst_11 : f32 to vector<1x128xf32>
    %23 = arith.addf %21, %22 : vector<1x128xf32>
    %24 = math.rsqrt %23 : vector<1x128xf32>
    %c0_12 = arith.constant 0 : index
    %c0_13 = arith.constant 0 : index
    %25 = vector.load %arg4[%c0_12, %c0_13] : memref<1x128xf32, #tpu.memory_space<vmem>>, vector<1x128xf32>
    %26 = arith.mulf %24, %25 : vector<1x128xf32>
    %c0_14 = arith.constant 0 : index
    %c0_15 = arith.constant 0 : index
    %27 = vector.load %arg5[%c0_14, %c0_15] : memref<1x128xf32, #tpu.memory_space<vmem>>, vector<1x128xf32>
    %28 = arith.mulf %18, %26 : vector<1x128xf32>
    %29 = arith.subf %27, %28 : vector<1x128xf32>
    %30 = vector.broadcast %26 : vector<1x128xf32> to vector<14x128xf32>
    %31 = arith.mulf %7, %30 : vector<14x128xf32>
    %32 = vector.broadcast %29 : vector<1x128xf32> to vector<14x128xf32>
    %33 = arith.addf %31, %32 : vector<14x128xf32>
    %c0_16 = arith.constant 0 : index
    %c0_17 = arith.constant 0 : index
    %34 = vector.load %arg6[%c0_16, %c0_17] : memref<14x128xf32, #tpu.memory_space<vmem>>, vector<14x128xf32>
    tpu.vector_store %arg6[%c0_16, %c0_17], %33 {strides = array<i32>} : memref<14x128xf32, #tpu.memory_space<vmem>>, vector<14x128xf32>,
    return
  }
  func.func @transform_0(%arg0: i32) -> (i32, i32) {
    %c0_i32 = arith.constant 0 : i32
    %c0_i32_0 = arith.constant 0 : i32
    %c0_i32_1 = arith.constant 0 : i32
    return %c0_i32, %c0_i32_0 : i32, i32
  }
  func.func @transform_1(%arg0: i32) -> (i32, i32) {
    %c0_i32 = arith.constant 0 : i32
    %c0_i32_0 = arith.constant 0 : i32
    %c0_i32_1 = arith.constant 0 : i32
    return %c0_i32, %c0_i32_0 : i32, i32
  }
  func.func @transform_2(%arg0: i32) -> (i32, i32) {
    %c0_i32 = arith.constant 0 : i32
    %c0_i32_0 = arith.constant 0 : i32
    %c0_i32_1 = arith.constant 0 : i32
    return %c0_i32, %c0_i32_0 : i32, i32
  }
  func.func @transform_3(%arg0: i32) -> (i32, i32) {
    %c0_i32 = arith.constant 0 : i32
    %c0_i32_0 = arith.constant 0 : i32
    %c0_i32_1 = arith.constant 0 : i32
    return %c0_i32, %c0_i32_0 : i32, i32
  }
  func.func @transform_4(%arg0: i32) -> (i32, i32) {
    %c0_i32 = arith.constant 0 : i32
    %c0_i32_0 = arith.constant 0 : i32
    %c0_i32_1 = arith.constant 0 : i32
    return %c0_i32, %c0_i32_0 : i32, i32
  }
  func.func @transform_5(%arg0: i32) -> (i32, i32) {
    %c0_i32 = arith.constant 0 : i32
    %c0_i32_0 = arith.constant 0 : i32
    %c0_i32_1 = arith.constant 0 : i32
    return %c0_i32, %c0_i32_0 : i32, i32
  }
}

</mosaic_0001>

<llo_original>
// kernel: forward.1
$region0: #{forward.1}
  #allocation0 [shape = 'u32[]', space=smem, size = 0x4, offset = 0x4, fixed_abs, tag = 'smem constant byte address 0x4 - core index']
  #allocation1 [shape = 'u32[144,128]{1,0:T(1,128)}', space=vmem, size = 0x12000, scoped, tag = 'internal scratch']
  %s0 = inlined_call_operand.vmem [shape: f32[14,384], index: 0, kind: input, shape index: {}]
  %s1 = inlined_call_operand.vmem [shape: f32[384,128], index: 1, kind: input, shape index: {}]
  %s2 = inlined_call_operand.vmem [shape: f32[128,128], index: 2, kind: input, shape index: {}]
  %s3 = inlined_call_operand.vmem [shape: f32[1,128], index: 3, kind: input, shape index: {}]
  %s4 = inlined_call_operand.vmem [shape: f32[1,128], index: 4, kind: input, shape index: {}]
  %s5 = inlined_call_operand.vmem [shape: f32[14,128], index: 5, kind: output, shape index: {}]
  %s6 = sld [smem:[#allocation0]]
  $region30: #{forward.1} parent=0
    _
  %s8 = ssub.s32 1, %s6
  %s9 = scalar_select 0, %s8, %s6
  // Predicated region
  $region2: #{forward.1} parent=0 // pred_check
    _
  $region3: #{forward.1} parent=0 // pred_check_branch
    %11 = sbr.rel (0) target = $region5
  $region4: #{forward.1} parent=0 // pred_region
    _
  $region5: #{forward.1} parent=0 // pred_fallthru
    _
  // Predicated region
  $region6: #{forward.1} parent=0 // pred_check
    _
  $region7: #{forward.1} parent=0 // pred_check_branch
    %13 = sbr.rel (0) target = $region9
  $region8: #{forward.1} parent=0 // pred_region
    _
  $region9: #{forward.1} parent=0 // pred_fallthru
    _
  // Predicated region
  $region10: #{forward.1} parent=0 // pred_check
    _
  $region11: #{forward.1} parent=0 // pred_check_branch
    %15 = sbr.rel (0) target = $region13
  $region12: #{forward.1} parent=0 // pred_region
    _
  $region13: #{forward.1} parent=0 // pred_fallthru
    _
  // Predicated region
  $region14: #{forward.1} parent=0 // pred_check
    _
  $region15: #{forward.1} parent=0 // pred_check_branch
    %17 = sbr.rel (0) target = $region17
  $region16: #{forward.1} parent=0 // pred_region
    _
  $region17: #{forward.1} parent=0 // pred_fallthru
    _
  // Predicated region
  $region18: #{forward.1} parent=0 // pred_check
    _
  $region19: #{forward.1} parent=0 // pred_check_branch
    %19 = sbr.rel (0) target = $region21
  $region20: #{forward.1} parent=0 // pred_region
    _
  $region21: #{forward.1} parent=0 // pred_fallthru
    _
  %v20 = vld [vmem:[%s0] sm:$0xff]
  %v21 = vld [vmem:[%s0 + $0x8] sm:$0xff]
  %v22 = vld [vmem:[%s0 + $0x10] sm:$0xff]
  %v23 = vld [vmem:[%s0 + $0x18] sm:$0x3f]
  %v24 = vld [vmem:[%s0 + $0x20] sm:$0x3f]
  %v25 = vld [vmem:[%s0 + $0x28] sm:$0x3f]
  %vm26 = vcmp.gt.f32.partialorder %v20, 0.0
  %vm27 = vcmp.gt.f32.partialorder %v21, 0.0
  %vm28 = vcmp.gt.f32.partialorder %v22, 0.0
  %vm29 = vcmp.gt.f32.partialorder %v23, 0.0
  %vm30 = vcmp.gt.f32.partialorder %v24, 0.0
  %vm31 = vcmp.gt.f32.partialorder %v25, 0.0
  %v32 = vmul.f32 %v20, 0.01
  %v33 = vmul.f32 %v21, 0.01
  %v34 = vmul.f32 %v22, 0.01
  %v35 = vmul.f32 %v23, 0.01
  %v36 = vmul.f32 %v24, 0.01
  %v37 = vmul.f32 %v25, 0.01
  %v38 = vsel %vm26, %v20, %v32
  %v39 = vsel %vm27, %v21, %v33
  %v40 = vsel %vm28, %v22, %v34
  %v41 = vsel %vm29, %v23, %v35
  %v42 = vsel %vm30, %v24, %v36
  %v43 = vsel %vm31, %v25, %v37
  %v44 = vld [vmem:[%s1] sm:$0xff]
  %v45 = vld [vmem:[%s1 + $0x8] sm:$0xff]
  %v46 = vld [vmem:[%s1 + $0x10] sm:$0xff]
  %v47 = vld [vmem:[%s1 + $0x18] sm:$0xff]
  %v48 = vld [vmem:[%s1 + $0x20] sm:$0xff]
  %v49 = vld [vmem:[%s1 + $0x28] sm:$0xff]
  %v50 = vld [vmem:[%s1 + $0x30] sm:$0xff]
  %v51 = vld [vmem:[%s1 + $0x38] sm:$0xff]
  %v52 = vld [vmem:[%s1 + $0x40] sm:$0xff]
  %v53 = vld [vmem:[%s1 + $0x48] sm:$0xff]
  %v54 = vld [vmem:[%s1 + $0x50] sm:$0xff]
  %v55 = vld [vmem:[%s1 + $0x58] sm:$0xff]
  %v56 = vld [vmem:[%s1 + $0x60] sm:$0xff]
  %v57 = vld [vmem:[%s1 + $0x68] sm:$0xff]
  %v58 = vld [vmem:[%s1 + $0x70] sm:$0xff]
  %v59 = vld [vmem:[%s1 + $0x78] sm:$0xff]
  %v60 = vld [vmem:[%s1 + $0x80] sm:$0xff]
  %v61 = vld [vmem:[%s1 + $0x88] sm:$0xff]
  %v62 = vld [vmem:[%s1 + $0x90] sm:$0xff]
  %v63 = vld [vmem:[%s1 + $0x98] sm:$0xff]
  %v64 = vld [vmem:[%s1 + $0xa0] sm:$0xff]
  %v65 = vld [vmem:[%s1 + $0xa8] sm:$0xff]
  %v66 = vld [vmem:[%s1 + $0xb0] sm:$0xff]
  %v67 = vld [vmem:[%s1 + $0xb8] sm:$0xff]
  %v68 = vld [vmem:[%s1 + $0xc0] sm:$0xff]
  %v69 = vld [vmem:[%s1 + $0xc8] sm:$0xff]
  %v70 = vld [vmem:[%s1 + $0xd0] sm:$0xff]
  %v71 = vld [vmem:[%s1 + $0xd8] sm:$0xff]
  %v72 = vld [vmem:[%s1 + $0xe0] sm:$0xff]
  %v73 = vld [vmem:[%s1 + $0xe8] sm:$0xff]
  %v74 = vld [vmem:[%s1 + $0xf0] sm:$0xff]
  %v75 = vld [vmem:[%s1 + $0xf8] sm:$0xff]
  %v76 = vld [vmem:[%s1 + $0x100] sm:$0xff]
  %v77 = vld [vmem:[%s1 + $0x108] sm:$0xff]
  %v78 = vld [vmem:[%s1 + $0x110] sm:$0xff]
  %v79 = vld [vmem:[%s1 + $0x118] sm:$0xff]
  %v80 = vld [vmem:[%s1 + $0x120] sm:$0xff]
  %v81 = vld [vmem:[%s1 + $0x128] sm:$0xff]
  %v82 = vld [vmem:[%s1 + $0x130] sm:$0xff]
  %v83 = vld [vmem:[%s1 + $0x138] sm:$0xff]
  %v84 = vld [vmem:[%s1 + $0x140] sm:$0xff]
  %v85 = vld [vmem:[%s1 + $0x148] sm:$0xff]
  %v86 = vld [vmem:[%s1 + $0x150] sm:$0xff]
  %v87 = vld [vmem:[%s1 + $0x158] sm:$0xff]
  %v88 = vld [vmem:[%s1 + $0x160] sm:$0xff]
  %v89 = vld [vmem:[%s1 + $0x168] sm:$0xff]
  %v90 = vld [vmem:[%s1 + $0x170] sm:$0xff]
  %v91 = vld [vmem:[%s1 + $0x178] sm:$0xff]
  %92 = vmatprep.subr.mxu0 0.0
  %93 = vmatpush1.msra.mxu0 %v59
  %94 = vmatprep.subr.mxu0 0.0
  %95 = vmatpush1.msra.mxu0 %v58
  %96 = vmatprep.subr.mxu0 0.0
  %97 = vmatpush1.msra.mxu0 %v57
  %98 = vmatprep.subr.mxu0 0.0
  %99 = vmatpush1.msra.mxu0 %v56
  %100 = vmatprep.subr.mxu0 0.0
  %101 = vmatpush1.msra.mxu0 %v55
  %102 = vmatprep.subr.mxu0 0.0
  %103 = vmatpush1.msra.mxu0 %v54
  %104 = vmatprep.subr.mxu0 0.0
  %105 = vmatpush1.msra.mxu0 %v53
  %106 = vmatprep.subr.mxu0 0.0
  %107 = vmatpush1.msra.mxu0 %v52
  %108 = vmatprep.subr.mxu0 0.0
  %109 = vmatpush1.msra.mxu0 %v51
  %110 = vmatprep.subr.mxu0 0.0
  %111 = vmatpush1.msra.mxu0 %v50
  %112 = vmatprep.subr.mxu0 0.0
  %113 = vmatpush1.msra.mxu0 %v49
  %114 = vmatprep.subr.mxu0 0.0
  %115 = vmatpush1.msra.mxu0 %v48
  %116 = vmatprep.subr.mxu0 0.0
  %117 = vmatpush1.msra.mxu0 %v47
  %118 = vmatprep.subr.mxu0 0.0
  %119 = vmatpush1.msra.mxu0 %v46
  %120 = vmatprep.subr.mxu0 0.0
  %121 = vmatpush1.msra.mxu0 %v45
  %122 = vmatprep.subr.mxu0 0.0
  %123 = vmatpush1.msra.mxu0 %v44
  %124 = vmatprep.subr.mxu0 0.0
  %125 = vmatpush2.msra.mxu0 %v75
  %126 = vmatprep.subr.mxu0 0.0
  %127 = vmatpush2.msra.mxu0 %v74
  %128 = vmatprep.subr.mxu0 0.0
  %129 = vmatpush2.msra.mxu0 %v73
  %130 = vmatprep.subr.mxu0 0.0
  %131 = vmatpush2.msra.mxu0 %v72
  %132 = vmatprep.subr.mxu0 0.0
  %133 = vmatpush2.msra.mxu0 %v71
  %134 = vmatprep.subr.mxu0 0.0
  %135 = vmatpush2.msra.mxu0 %v70
  %136 = vmatprep.subr.mxu0 0.0
  %137 = vmatpush2.msra.mxu0 %v69
  %138 = vmatprep.subr.mxu0 0.0
  %139 = vmatpush2.msra.mxu0 %v68
  %140 = vmatprep.subr.mxu0 0.0
  %141 = vmatpush2.msra.mxu0 %v67
  %142 = vmatprep.subr.mxu0 0.0
  %143 = vmatpush2.msra.mxu0 %v66
  %144 = vmatprep.subr.mxu0 0.0
  %145 = vmatpush2.msra.mxu0 %v65
  %146 = vmatprep.subr.mxu0 0.0
  %147 = vmatpush2.msra.mxu0 %v64
  %148 = vmatprep.subr.mxu0 0.0
  %149 = vmatpush2.msra.mxu0 %v63
  %150 = vmatprep.subr.mxu0 0.0
  %151 = vmatpush2.msra.mxu0 %v62
  %152 = vmatprep.subr.mxu0 0.0
  %153 = vmatpush2.msra.mxu0 %v61
  %154 = vmatprep.subr.mxu0 0.0
  %155 = vmatpush2.msra.mxu0 %v60
  %156 = vmatprep.mubr.f32.mxu0 %v39
  %157 = vmatmul.mubr.f32.gmra.mxu0 %v38
  %v158 = vpop.f32.mrf.mxu0
  %v159 = vadd.f32 0.0, %v158
  %v160 = vpop.f32.mrf.mxu0
  %161 = vmatprep.mubr.f32.mxu0 %v42
  %162 = vmatmul.mubr.f32.gmra.mxu0 %v41
  %v163 = vpop.f32.mrf.mxu0
  %v164 = vadd.f32 0.0, %v163
  %v165 = vpop.f32.mrf.mxu0
  %166 = vdwg.mxu0
  %167 = vmatprep.subr.mxu0 0.0
  %168 = vmatpush1.msra.mxu0 %v91
  %169 = vmatprep.subr.mxu0 0.0
  %170 = vmatpush1.msra.mxu0 %v90
  %171 = vmatprep.subr.mxu0 0.0
  %172 = vmatpush1.msra.mxu0 %v89
  %173 = vmatprep.subr.mxu0 0.0
  %174 = vmatpush1.msra.mxu0 %v88
  %175 = vmatprep.subr.mxu0 0.0
  %176 = vmatpush1.msra.mxu0 %v87
  %177 = vmatprep.subr.mxu0 0.0
  %178 = vmatpush1.msra.mxu0 %v86
  %179 = vmatprep.subr.mxu0 0.0
  %180 = vmatpush1.msra.mxu0 %v85
  %181 = vmatprep.subr.mxu0 0.0
  %182 = vmatpush1.msra.mxu0 %v84
  %183 = vmatprep.subr.mxu0 0.0
  %184 = vmatpush1.msra.mxu0 %v83
  %185 = vmatprep.subr.mxu0 0.0
  %186 = vmatpush1.msra.mxu0 %v82
  %187 = vmatprep.subr.mxu0 0.0
  %188 = vmatpush1.msra.mxu0 %v81
  %189 = vmatprep.subr.mxu0 0.0
  %190 = vmatpush1.msra.mxu0 %v80
  %191 = vmatprep.subr.mxu0 0.0
  %192 = vmatpush1.msra.mxu0 %v79
  %193 = vmatprep.subr.mxu0 0.0
  %194 = vmatpush1.msra.mxu0 %v78
  %195 = vmatprep.subr.mxu0 0.0
  %196 = vmatpush1.msra.mxu0 %v77
  %197 = vmatprep.subr.mxu0 0.0
  %198 = vmatpush1.msra.mxu0 %v76
  %199 = vmatprep.subr.mxu0 0.0
  %200 = vmatpush2.msra.mxu0 0.0
  %201 = vmatprep.subr.mxu0 0.0
  %202 = vmatpush2.msra.mxu0 0.0
  %203 = vmatprep.subr.mxu0 0.0
  %204 = vmatpush2.msra.mxu0 0.0
  %205 = vmatprep.subr.mxu0 0.0
  %206 = vmatpush2.msra.mxu0 0.0
  %207 = vmatprep.subr.mxu0 0.0
  %208 = vmatpush2.msra.mxu0 0.0
  %209 = vmatprep.subr.mxu0 0.0
  %210 = vmatpush2.msra.mxu0 0.0
  %211 = vmatprep.subr.mxu0 0.0
  %212 = vmatpush2.msra.mxu0 0.0
  %213 = vmatprep.subr.mxu0 0.0
  %214 = vmatpush2.msra.mxu0 0.0
  %215 = vmatprep.subr.mxu0 0.0
  %216 = vmatpush2.msra.mxu0 0.0
  %217 = vmatprep.subr.mxu0 0.0
  %218 = vmatpush2.msra.mxu0 0.0
  %219 = vmatprep.subr.mxu0 0.0
  %220 = vmatpush2.msra.mxu0 0.0
  %221 = vmatprep.subr.mxu0 0.0
  %222 = vmatpush2.msra.mxu0 0.0
  %223 = vmatprep.subr.mxu0 0.0
  %224 = vmatpush2.msra.mxu0 0.0
  %225 = vmatprep.subr.mxu0 0.0
  %226 = vmatpush2.msra.mxu0 0.0
  %227 = vmatprep.subr.mxu0 0.0
  %228 = vmatpush2.msra.mxu0 0.0
  %229 = vmatprep.subr.mxu0 0.0
  %230 = vmatpush2.msra.mxu0 0.0
  %231 = vmatprep.mubr.f32.mxu0 0.0
  %232 = vmatmul.mubr.f32.gmra.mxu0 %v40
  %v233 = vpop.f32.mrf.mxu0
  %v234 = vadd.f32 %v159, %v233
  %v235 = vpop.f32.mrf.mxu0
  %236 = vmatprep.mubr.f32.mxu0 0.0
  %237 = vmatmul.mubr.f32.gmra.mxu0 %v43
  %v238 = vpop.f32.mrf.mxu0
  %v239 = vadd.f32 %v164, %v238
  %v240 = vpop.f32.mrf.mxu0
  %241 = vdwg.mxu0
  %vm242 = vcmask 1045504
  %v243 = vsel %vm242, %v239, 0.0
  %v244 = vadd.f32 %v234, %v243
  %v245 = vrot.slane %v244, 4
  %v246 = vadd.f32 %v244, %v245
  %v247 = vrot.slane %v246, 2
  %v248 = vadd.f32 %v246, %v247
  %v249 = vrot.slane %v248, 1
  %v250 = vadd.f32 %v248, %v249
  %v251 = vmul.f32 %v234, %v234
  %v252 = vmul.f32 %v239, %v239
  %v253 = vsel %vm242, %v252, 0.0
  %v254 = vadd.f32 %v251, %v253
  %v255 = vrot.slane %v254, 4
  %v256 = vadd.f32 %v254, %v255
  %v257 = vrot.slane %v256, 2
  %v258 = vadd.f32 %v256, %v257
  %v259 = vrot.slane %v258, 1
  %v260 = vadd.f32 %v258, %v259
  %vm261 = vcmask 1040384
  %v262 = vsel %vm261, %v250, %v260
  %v263 = vld [vmem:[%s2] sm:$0xff]
  %v264 = vld [vmem:[%s2 + $0x8] sm:$0xff]
  %v265 = vld [vmem:[%s2 + $0x10] sm:$0xff]
  %v266 = vld [vmem:[%s2 + $0x18] sm:$0xff]
  %v267 = vld [vmem:[%s2 + $0x20] sm:$0xff]
  %v268 = vld [vmem:[%s2 + $0x28] sm:$0xff]
  %v269 = vld [vmem:[%s2 + $0x30] sm:$0xff]
  %v270 = vld [vmem:[%s2 + $0x38] sm:$0xff]
  %v271 = vld [vmem:[%s2 + $0x40] sm:$0xff]
  %v272 = vld [vmem:[%s2 + $0x48] sm:$0xff]
  %v273 = vld [vmem:[%s2 + $0x50] sm:$0xff]
  %v274 = vld [vmem:[%s2 + $0x58] sm:$0xff]
  %v275 = vld [vmem:[%s2 + $0x60] sm:$0xff]
  %v276 = vld [vmem:[%s2 + $0x68] sm:$0xff]
  %v277 = vld [vmem:[%s2 + $0x70] sm:$0xff]
  %v278 = vld [vmem:[%s2 + $0x78] sm:$0xff]
  %279 = vmatprep.subr.mxu0 0.0
  %280 = vmatpush1.msra.mxu0 %v278
  %281 = vmatprep.subr.mxu0 0.0
  %282 = vmatpush1.msra.mxu0 %v277
  %283 = vmatprep.subr.mxu0 0.0
  %284 = vmatpush1.msra.mxu0 %v276
  %285 = vmatprep.subr.mxu0 0.0
  %286 = vmatpush1.msra.mxu0 %v275
  %287 = vmatprep.subr.mxu0 0.0
  %288 = vmatpush1.msra.mxu0 %v274
  %289 = vmatprep.subr.mxu0 0.0
  %290 = vmatpush1.msra.mxu0 %v273
  %291 = vmatprep.subr.mxu0 0.0
  %292 = vmatpush1.msra.mxu0 %v272
  %293 = vmatprep.subr.mxu0 0.0
  %294 = vmatpush1.msra.mxu0 %v271
  %295 = vmatprep.subr.mxu0 0.0
  %296 = vmatpush1.msra.mxu0 %v270
  %297 = vmatprep.subr.mxu0 0.0
  %298 = vmatpush1.msra.mxu0 %v269
  %299 = vmatprep.subr.mxu0 0.0
  %300 = vmatpush1.msra.mxu0 %v268
  %301 = vmatprep.subr.mxu0 0.0
  %302 = vmatpush1.msra.mxu0 %v267
  %303 = vmatprep.subr.mxu0 0.0
  %304 = vmatpush1.msra.mxu0 %v266
  %305 = vmatprep.subr.mxu0 0.0
  %306 = vmatpush1.msra.mxu0 %v265
  %307 = vmatprep.subr.mxu0 0.0
  %308 = vmatpush1.msra.mxu0 %v264
  %309 = vmatprep.subr.mxu0 0.0
  %310 = vmatpush1.msra.mxu0 %v263
  %311 = vmatprep.subr.mxu0 0.0
  %312 = vmatpush2.msra.mxu0 0.0
  %313 = vmatprep.subr.mxu0 0.0
  %314 = vmatpush2.msra.mxu0 0.0
  %315 = vmatprep.subr.mxu0 0.0
  %316 = vmatpush2.msra.mxu0 0.0
  %317 = vmatprep.subr.mxu0 0.0
  %318 = vmatpush2.msra.mxu0 0.0
  %319 = vmatprep.subr.mxu0 0.0
  %320 = vmatpush2.msra.mxu0 0.0
  %321 = vmatprep.subr.mxu0 0.0
  %322 = vmatpush2.msra.mxu0 0.0
  %323 = vmatprep.subr.mxu0 0.0
  %324 = vmatpush2.msra.mxu0 0.0
  %325 = vmatprep.subr.mxu0 0.0
  %326 = vmatpush2.msra.mxu0 0.0
  %327 = vmatprep.subr.mxu0 0.0
  %328 = vmatpush2.msra.mxu0 0.0
  %329 = vmatprep.subr.mxu0 0.0
  %330 = vmatpush2.msra.mxu0 0.0
  %331 = vmatprep.subr.mxu0 0.0
  %332 = vmatpush2.msra.mxu0 0.0
  %333 = vmatprep.subr.mxu0 0.0
  %334 = vmatpush2.msra.mxu0 0.0
  %335 = vmatprep.subr.mxu0 0.0
  %336 = vmatpush2.msra.mxu0 0.0
  %337 = vmatprep.subr.mxu0 0.0
  %338 = vmatpush2.msra.mxu0 0.0
  %339 = vmatprep.subr.mxu0 0.0
  %340 = vmatpush2.msra.mxu0 0.0
  %341 = vmatprep.subr.mxu0 0.0
  %342 = vmatpush2.msra.mxu0 0.0
  %343 = vmatprep.mubr.f32.mxu0 0.0
  %344 = vmatmul.mubr.f32.gmra.mxu0 %v262
  %v345 = vpop.f32.mrf.mxu0
  %v346 = vadd.f32 0.0, %v345
  %v347 = vpop.f32.mrf.mxu0
  %348 = vdwg.mxu0
  %v349 = vmul.f32 %v346, 0.004464286
  %v350 = vmul.f32 %v349, %v349
  %v352 = vrot.slane %v350, 7
  %v354 = vsub.f32 %v349, %v352
  %v355 = vadd.f32 %v354, 1e-05
  %v356 = vrsqrt.pop %v355
  %v357 = vld [vmem:[%s3] sm:$0x1]
  %v359 = vlaneseq
  %v360 = vshrl.u32 %v359, 7
  %v361 = vsub.s32 0, %v360
  %v362 = vrot.slane %v357, %v361
  %v364 = vmul.f32 %v356, %v362
  %v365 = vld [vmem:[%s4] sm:$0x1]
  %v367 = vrot.slane %v364, 1
  %v369 = vmul.f32 %v349, %v367
  %v370 = vsub.f32 %v365, %v369
  %v371 = vlaneseq
  %v372 = vshrl.u32 %v371, 7
  %v373 = vsub.s32 1, %v372
  %v374 = vrot.slane %v364, %v373
  %v375 = vmul.f32 %v234, %v374
  %v376 = vmul.f32 %v239, %v374
  %v378 = vlaneseq
  %v379 = vshrl.u32 %v378, 7
  %v380 = vsub.s32 0, %v379
  %v381 = vrot.slane %v370, %v380
  %v383 = vadd.f32 %v375, %v381
  %v384 = vadd.f32 %v376, %v381
  %385 = vst [vmem:[%s5] sm:$0xff] %v383
  %386 = vst [vmem:[%s5 + $0x8] sm:$0x3f] %v384
  // Predicated region
  $region22: #{forward.1} parent=0 // pred_check
    _
  $region23: #{forward.1} parent=0 // pred_check_branch
    %388 = sbr.rel (0) target = $region25
  $region24: #{forward.1} parent=0 // pred_region
    _
  $region25: #{forward.1} parent=0 // pred_fallthru
    _
  // Predicated region
  $region26: #{forward.1} parent=0 // pred_check
    _
  $region27: #{forward.1} parent=0 // pred_check_branch
    %390 = sbr.rel (0) target = $region29
  $region28: #{forward.1} parent=0 // pred_region
    _
  $region29: #{forward.1} parent=0 // pred_fallthru
    _

</llo_original>
